<compile_context>
chip_gen: v6e
topology: v6e:2x2x1
jax: 0.10.0
libtpu: 0.0.40
codegen_flags: <defaults>
</compile_context>

<pallas_src>
import functools

import jax
import jax.numpy as jnp
import numpy as np
from jax import lax
from jax.experimental import pallas as pl
from jax.experimental.pallas import tpu as pltpu

R_TILE = 16                 # sublane rows per time tile (multiple of 8)
LANE = 128                  # lane width
TILE_T = R_TILE * LANE      # 2048 samples per grid step


def _sox_fused_kernel(wav_ref, out_ref, bounds_ref,
                      mono_s, peak_s, gain_s, idx_s,
                      *, target_amp, thr):
    p = pl.program_id(0)          # phase: 0 = mix+peak, 1 = norm + trim index
    i = pl.program_id(1)          # time tile
    n_tiles = pl.num_programs(1)
    C = wav_ref.shape[0]
    r_tile, lane = out_ref.shape

    @pl.when((p == 0) & (i == 0))
    def _init():
        peak_s[...] = jnp.zeros_like(peak_s)
        idx_s[0] = jnp.int32(2 ** 30)   # running min above-threshold index
        idx_s[1] = jnp.int32(-1)        # running max above-threshold index

    @pl.when(p == 0)
    def _mix_and_peak():
        acc = wav_ref[0]
        for c in range(1, C):           # static unroll; pure VPU adds, no XLU
            acc = acc + wav_ref[c]
        mono = acc * jnp.float32(1.0 / C)
        mono_s[i] = mono                                   # stays in VMEM
        peak_s[...] = jnp.maximum(peak_s[...], jnp.abs(mono))

    @pl.when((p == 1) & (i == 0))
    def _finalize_gain():
        peak = jnp.max(peak_s[...])                        # one XLU reduce total
        safe = jnp.maximum(peak, jnp.float32(1e-30))
        gain_s[0] = jnp.where(peak > 0.0,
                              jnp.float32(target_amp) / safe,
                              jnp.float32(1.0))

    @pl.when(p == 1)
    def _norm_and_trim():
        x = mono_s[i] * gain_s[0]
        out_ref[...] = x                                   # dense, unmasked vst
        r_idx = lax.broadcasted_iota(jnp.int32, (r_tile, lane), 0)
        l_idx = lax.broadcasted_iota(jnp.int32, (r_tile, lane), 1)
        t_idx = (i * r_tile + r_idx) * lane + l_idx        # absolute sample index
        above = jnp.abs(x) > jnp.float32(thr)
        idx_s[0] = jnp.minimum(
            idx_s[0], jnp.min(jnp.where(above, t_idx, jnp.int32(2 ** 30))))
        idx_s[1] = jnp.maximum(
            idx_s[1], jnp.max(jnp.where(above, t_idx, jnp.int32(-1))))

    @pl.when((p == 1) & (i == n_tiles - 1))
    def _emit_bounds():
        col = lax.broadcasted_iota(jnp.int32, (1, 2), 1)
        bounds_ref[...] = jnp.where(col == 0, idx_s[0], idx_s[1] + 1)


@functools.partial(jax.jit, static_argnames=("norm_db", "sil_threshold"))
def sox_effects_core(wav, norm_db, sil_threshold):
    """Returns (normalized mono (1, T_pad), (1, 2) int32 [start, stop))."""
    wav = wav.astype(jnp.float32)
    C, T = wav.shape
    T_pad = ((T + TILE_T - 1) // TILE_T) * TILE_T
    wav = jnp.pad(wav, ((0, 0), (0, T_pad - T)))   # zero pad: safe for peak/trim
    R_pad = T_pad // LANE
    n_tiles = T_pad // TILE_T
    wav3 = wav.reshape(C, R_pad, LANE)

    # VMEM budget: resident mono + peak acc + double-buffered streams. Explicit
    # limit so a v7x (64 MiB physical) build does not silently overshoot.
    tile_bytes = TILE_T * 4
    vmem_needed = (T_pad * 4              # resident mono scratch
                   + tile_bytes           # peak accumulator
                   + 2 * C * tile_bytes   # double-buffered wav input
                   + 2 * tile_bytes)      # double-buffered normed output
    assert vmem_needed < 44 * (1 << 20), "resident-mono plan exceeds v7x VMEM budget"
    # TODO(synk): for audio longer than the resident-mono VMEM budget, fall back
    # to a two-pass (mono-through-HBM) kernel instead of asserting.
    vmem_limit = int(min(max(2 * vmem_needed, 32 * (1 << 20)), 48 * (1 << 20)))

    kernel = functools.partial(
        _sox_fused_kernel,
        target_amp=float(10.0 ** (norm_db / 20.0)),
        thr=float(sil_threshold) / 100.0,   # sox silence threshold is % of FS
    )
    normed2d, bounds = pl.pallas_call(
        kernel,
        out_shape=(
            jax.ShapeDtypeStruct((R_pad, LANE), jnp.float32),
            jax.ShapeDtypeStruct((1, 2), jnp.int32),
        ),
        grid_spec=pltpu.PrefetchScalarGridSpec(
            num_scalar_prefetch=0,
            grid=(2, n_tiles),                      # (phase, time tile)
            in_specs=[
                # Freeze wav on block 0 during phase 1 so it is not re-read.
                pl.BlockSpec((C, R_TILE, LANE), lambda p, i: (0, i * (1 - p), 0)),
            ],
            out_specs=(
                # Resident on block 0 during phase 0 (nothing written there);
                # one dense store per tile during phase 1.
                pl.BlockSpec((R_TILE, LANE), lambda p, i: (i * p, 0)),
                pl.BlockSpec((1, 2), lambda p, i: (0, 0)),
            ),
            scratch_shapes=[
                pltpu.VMEM((n_tiles, R_TILE, LANE), jnp.float32),  # resident mono
                pltpu.VMEM((R_TILE, LANE), jnp.float32),           # |mono| max acc
                pltpu.SMEM((1,), jnp.float32),                     # gain scalar
                pltpu.SMEM((2,), jnp.int32),                       # first/last idx
            ],
        ),
        compiler_params=pltpu.CompilerParams(
            # Both axes sequential: phase 1 depends on phase 0's scratch and the
            # peak/trim accumulators live in per-core scratch.
            # TODO(synk): v7x megacore split (per-core partial peaks + cross-core
            # reduce) not implemented; kernel runs on a single TensorCore.
            dimension_semantics=("arbitrary", "arbitrary"),
            vmem_limit_bytes=vmem_limit,
        ),
    )(wav3)
    return normed2d.reshape(1, T_pad), bounds


def sox_effects(wav, sample_rate, target_rate, norm_db, sil_threshold, sil_duration):
    """JAX/Pallas re-implementation of SoxEffects.forward."""
    C, T = wav.shape
    # TODO(synk): sox `rate` polyphase-sinc resampling not implemented; identity
    # assumed (input sample_rate == target_rate).
    assert sample_rate == target_rate

    normed, bounds = sox_effects_core(wav, float(norm_db), float(sil_threshold))
    b = np.asarray(jax.device_get(bounds))      # 8-byte D2H, no full-array copy
    start, stop = int(b[0, 0]), int(b[0, 1])
    stop = min(stop, T)
    start = min(start, stop)
    # TODO(synk): sox `silence` requires sil_duration seconds above threshold;
    # here trimming is to the first/last single above-threshold sample.
    return normed[:, start:stop]                # device-side slice, shape (1, L)


if __name__ == "__main__":
    SAMPLE_RATE = 16000
    NORM_DB = -3.0
    SIL_THRESHOLD = 1.0   # percent of full scale
    SIL_DURATION = 0.1

    key = jax.random.PRNGKey(0)
    C, T = 2, 20000       # not a tile multiple -> exercises explicit zero padding
    wav = 0.1 * jax.random.normal(key, (C, T), dtype=jnp.float32)
    # Make leading/trailing regions silent so the trim path is exercised.
    wav = wav.at[:, :1000].multiply(1e-4)
    wav = wav.at[:, -1000:].multiply(1e-4)

    out = sox_effects(wav, SAMPLE_RATE, SAMPLE_RATE, NORM_DB, SIL_THRESHOLD, SIL_DURATION)
    out = jax.block_until_ready(out)

    normed, bounds = sox_effects_core(wav, NORM_DB, SIL_THRESHOLD)
    jax.block_until_ready((normed, bounds))

    # Shape / trim sanity.
    assert out.ndim == 2 and out.shape[0] == 1 and 0 < out.shape[1] <= T

    # Peak normalization sanity.
    peak_after = float(jnp.max(jnp.abs(normed)))
    assert abs(peak_after - 10.0 ** (NORM_DB / 20.0)) < 1e-4

    # Trim-index cross-check against a numpy reference.
    wav_np = np.asarray(jax.device_get(wav))
    mono_ref = np.mean(wav_np, axis=0)
    peak_ref = float(np.max(np.abs(mono_ref)))
    gain_ref = (10.0 ** (NORM_DB / 20.0)) / peak_ref
    mask_ref = np.abs(mono_ref * gain_ref) > SIL_THRESHOLD / 100.0
    nz = np.nonzero(mask_ref)[0]
    start_ref, stop_ref = int(nz[0]), int(nz[-1]) + 1
    b = np.asarray(jax.device_get(bounds))
    assert abs(int(b[0, 0]) - start_ref) <= 1 and abs(int(b[0, 1]) - stop_ref) <= 1
    assert out.shape[1] == int(b[0, 1]) - int(b[0, 0])

    print("KERNEL_OK")
</pallas_src>

<mosaic_0001>
module attributes {stable_mosaic.version = 11 : i64} {
  func.func @_sox_fused_kernel(%arg0: i32, %arg1: i32, %arg2: memref<2x16x128xf32, #tpu.memory_space<vmem>>, %arg3: memref<16x128xf32, #tpu.memory_space<vmem>>, %arg4: memref<1x2xi32, #tpu.memory_space<vmem>>, %arg5: memref<10x16x128xf32, #tpu.memory_space<vmem>>, %arg6: memref<16x128xf32, #tpu.memory_space<vmem>>, %arg7: memref<1xf32, #tpu.memory_space<smem>>, %arg8: memref<2xi32, #tpu.memory_space<smem>>) attributes {dimension_semantics = [#tpu.dimension_semantics<arbitrary>, #tpu.dimension_semantics<arbitrary>], iteration_bounds = array<i64: 2, 10>, scalar_prefetch = 0 : i64, scratch_operands = 4 : i64, tpu.core_type = #tpu.core_type<tc>, window_params = [{transform_indices = @transform_0, window_bounds = array<i64: 2, 16, 128>}, {transform_indices = @transform_1, window_bounds = array<i64: 16, 128>}, {pipeline_mode = #tpu.pipeline_mode<synchronous>, transform_indices = @transform_2, window_bounds = array<i64: 1, 2>}]} {
    %c0_i32 = arith.constant 0 : i32
    %0 = arith.cmpi eq, %arg0, %c0_i32 : i32
    %c0_i32_0 = arith.constant 0 : i32
    %1 = arith.cmpi eq, %arg1, %c0_i32_0 : i32
    %2 = arith.andi %0, %1 : i1
    %3 = arith.extui %2 : i1 to i32
    %c0_i32_1 = arith.constant 0 : i32
    %4 = arith.cmpi ne, %3, %c0_i32_1 : i32
    scf.if %4 {
      %cst = arith.constant 0.000000e+00 : f32
      %21 = vector.broadcast %cst : f32 to vector<16x128xf32>
      %c0 = arith.constant 0 : index
      %c0_10 = arith.constant 0 : index
      %22 = vector.load %arg6[%c0, %c0_10] : memref<16x128xf32, #tpu.memory_space<vmem>>, vector<16x128xf32>
      tpu.vector_store %arg6[%c0, %c0_10], %21 {strides = array<i32>} : memref<16x128xf32, #tpu.memory_space<vmem>>, vector<16x128xf32>,
      %c1073741824_i32 = arith.constant 1073741824 : i32
      %c0_11 = arith.constant 0 : index
      %23 = memref.load %arg8[%c0_11] : memref<2xi32, #tpu.memory_space<smem>>
      memref.store %c1073741824_i32, %arg8[%c0_11] : memref<2xi32, #tpu.memory_space<smem>>
      %c-1_i32 = arith.constant -1 : i32
      %c1 = arith.constant 1 : index
      %24 = memref.load %arg8[%c1] : memref<2xi32, #tpu.memory_space<smem>>
      memref.store %c-1_i32, %arg8[%c1] : memref<2xi32, #tpu.memory_space<smem>>
    } else {
    }
    %c0_i32_2 = arith.constant 0 : i32
    %5 = arith.cmpi eq, %arg0, %c0_i32_2 : i32
    %6 = arith.extui %5 : i1 to i32
    %c0_i32_3 = arith.constant 0 : i32
    %7 = arith.cmpi ne, %6, %c0_i32_3 : i32
    scf.if %7 {
      %c0 = arith.constant 0 : index
      %c0_10 = arith.constant 0 : index
      %c0_11 = arith.constant 0 : index
      %21 = vector.load %arg2[%c0, %c0_10, %c0_11] : memref<2x16x128xf32, #tpu.memory_space<vmem>>, vector<1x16x128xf32>
      %22 = vector.shape_cast %21 : vector<1x16x128xf32> to vector<16x128xf32>
      %c1 = arith.constant 1 : index
      %c0_12 = arith.constant 0 : index
      %c0_13 = arith.constant 0 : index
      %23 = vector.load %arg2[%c1, %c0_12, %c0_13] : memref<2x16x128xf32, #tpu.memory_space<vmem>>, vector<1x16x128xf32>
      %24 = vector.shape_cast %23 : vector<1x16x128xf32> to vector<16x128xf32>
      %25 = arith.addf %22, %24 : vector<16x128xf32>
      %cst = arith.constant 5.000000e-01 : f32
      %26 = vector.broadcast %cst : f32 to vector<16x128xf32>
      %27 = arith.mulf %25, %26 : vector<16x128xf32>
      %28 = arith.index_cast %arg1 : i32 to index
      %c0_14 = arith.constant 0 : index
      %c0_15 = arith.constant 0 : index
      %29 = vector.load %arg5[%28, %c0_14, %c0_15] : memref<10x16x128xf32, #tpu.memory_space<vmem>>, vector<1x16x128xf32>
      %30 = vector.shape_cast %29 : vector<1x16x128xf32> to vector<16x128xf32>
      %31 = vector.shape_cast %27 : vector<16x128xf32> to vector<1x16x128xf32>
      tpu.vector_store %arg5[%28, %c0_14, %c0_15], %31 {strides = array<i32>} : memref<10x16x128xf32, #tpu.memory_space<vmem>>, vector<1x16x128xf32>,
      %c0_16 = arith.constant 0 : index
      %c0_17 = arith.constant 0 : index
      %32 = vector.load %arg6[%c0_16, %c0_17] : memref<16x128xf32, #tpu.memory_space<vmem>>, vector<16x128xf32>
      %33 = math.absf %27 : vector<16x128xf32>
      %34 = arith.maximumf %32, %33 : vector<16x128xf32>
      %c0_18 = arith.constant 0 : index
      %c0_19 = arith.constant 0 : index
      %35 = vector.load %arg6[%c0_18, %c0_19] : memref<16x128xf32, #tpu.memory_space<vmem>>, vector<16x128xf32>
      tpu.vector_store %arg6[%c0_18, %c0_19], %34 {strides = array<i32>} : memref<16x128xf32, #tpu.memory_space<vmem>>, vector<16x128xf32>,
    } else {
    }
    %c1_i32 = arith.constant 1 : i32
    %8 = arith.cmpi eq, %arg0, %c1_i32 : i32
    %c0_i32_4 = arith.constant 0 : i32
    %9 = arith.cmpi eq, %arg1, %c0_i32_4 : i32
    %10 = arith.andi %8, %9 : i1
    %11 = arith.extui %10 : i1 to i32
    %c0_i32_5 = arith.constant 0 : i32
    %12 = arith.cmpi ne, %11, %c0_i32_5 : i32
    scf.if %12 {
      %c0 = arith.constant 0 : index
      %c0_10 = arith.constant 0 : index
      %21 = vector.load %arg6[%c0, %c0_10] : memref<16x128xf32, #tpu.memory_space<vmem>>, vector<16x128xf32>
      %22 = vector.shape_cast %21 : vector<16x128xf32> to vector<1x16x128xf32>
      %cst = arith.constant dense<0xFF800000> : vector<1xf32>
      %23 = vector.multi_reduction <maximumf>, %22, %cst [1, 2] : vector<1x16x128xf32> to vector<1xf32>
      %24 = vector.shape_cast %23 : vector<1xf32> to vector<1x1x1xf32>
      %25 = vector.extract %24[0, 0, 0] : f32 from vector<1x1x1xf32>
      %cst_11 = arith.constant 1.000000e-30 : f32
      %26 = arith.maximumf %25, %cst_11 : f32
      %cst_12 = arith.constant 0.000000e+00 : f32
      %27 = arith.cmpf ogt, %25, %cst_12 : f32
      %cst_13 = arith.constant 0.707945764 : f32
      %28 = arith.divf %cst_13, %26 : f32
      %cst_14 = arith.constant 1.000000e+00 : f32
      %29 = arith.select %27, %28, %cst_14 : f32
      %c0_15 = arith.constant 0 : index
      %30 = memref.load %arg7[%c0_15] : memref<1xf32, #tpu.memory_space<smem>>
      memref.store %29, %arg7[%c0_15] : memref<1xf32, #tpu.memory_space<smem>>
    } else {
    }
    %c1_i32_6 = arith.constant 1 : i32
    %13 = arith.cmpi eq, %arg0, %c1_i32_6 : i32
    %14 = arith.extui %13 : i1 to i32
    %c0_i32_7 = arith.constant 0 : i32
    %15 = arith.cmpi ne, %14, %c0_i32_7 : i32
    scf.if %15 {
      %21 = arith.index_cast %arg1 : i32 to index
      %c0 = arith.constant 0 : index
      %c0_10 = arith.constant 0 : index
      %22 = vector.load %arg5[%21, %c0, %c0_10] : memref<10x16x128xf32, #tpu.memory_space<vmem>>, vector<1x16x128xf32>
      %23 = vector.shape_cast %22 : vector<1x16x128xf32> to vector<16x128xf32>
      %c0_11 = arith.constant 0 : index
      %24 = memref.load %arg7[%c0_11] : memref<1xf32, #tpu.memory_space<smem>>
      %25 = vector.broadcast %24 : f32 to vector<16x128xf32>
      %26 = arith.mulf %23, %25 : vector<16x128xf32>
      %c0_12 = arith.constant 0 : index
      %c0_13 = arith.constant 0 : index
      %27 = vector.load %arg3[%c0_12, %c0_13] : memref<16x128xf32, #tpu.memory_space<vmem>>, vector<16x128xf32>
      tpu.vector_store %arg3[%c0_12, %c0_13], %26 {strides = array<i32>} : memref<16x128xf32, #tpu.memory_space<vmem>>, vector<16x128xf32>,
      %28 = tpu.iota {dimensions = array<i32: 0>} : vector<16x128xi32>
      %29 = tpu.iota {dimensions = array<i32: 1>} : vector<16x128xi32>
      %c16_i32 = arith.constant 16 : i32
      %30 = arith.muli %arg1, %c16_i32 : i32
      %31 = vector.broadcast %30 : i32 to vector<16x128xi32>
      %32 = arith.addi %31, %28 : vector<16x128xi32>
      %c128_i32 = arith.constant 128 : i32
      %33 = vector.broadcast %c128_i32 : i32 to vector<16x128xi32>
      %34 = arith.muli %32, %33 : vector<16x128xi32>
      %35 = arith.addi %34, %29 : vector<16x128xi32>
      %36 = math.absf %26 : vector<16x128xf32>
      %cst = arith.constant 0.00999999977 : f32
      %37 = vector.broadcast %cst : f32 to vector<16x128xf32>
      %38 = arith.cmpf ogt, %36, %37 : vector<16x128xf32>
      %c0_14 = arith.constant 0 : index
      %39 = memref.load %arg8[%c0_14] : memref<2xi32, #tpu.memory_space<smem>>
      %c1073741824_i32 = arith.constant 1073741824 : i32
      %40 = vector.broadcast %c1073741824_i32 : i32 to vector<16x128xi32>
      %41 = arith.select %38, %35, %40 : vector<16x128xi1>, vector<16x128xi32>
      %42 = vector.shape_cast %41 : vector<16x128xi32> to vector<1x16x128xi32>
      %cst_15 = arith.constant dense<2147483647> : vector<1xi32>
      %43 = vector.multi_reduction <minsi>, %42, %cst_15 [1, 2] : vector<1x16x128xi32> to vector<1xi32>
      %44 = vector.shape_cast %43 : vector<1xi32> to vector<1x1x1xi32>
      %45 = vector.extract %44[0, 0, 0] : i32 from vector<1x1x1xi32>
      %46 = arith.minsi %39, %45 : i32
      %c0_16 = arith.constant 0 : index
      %47 = memref.load %arg8[%c0_16] : memref<2xi32, #tpu.memory_space<smem>>
      memref.store %46, %arg8[%c0_16] : memref<2xi32, #tpu.memory_space<smem>>
      %c1 = arith.constant 1 : index
      %48 = memref.load %arg8[%c1] : memref<2xi32, #tpu.memory_space<smem>>
      %c-1_i32 = arith.constant -1 : i32
      %49 = vector.broadcast %c-1_i32 : i32 to vector<16x128xi32>
      %50 = arith.select %38, %35, %49 : vector<16x128xi1>, vector<16x128xi32>
      %51 = vector.shape_cast %50 : vector<16x128xi32> to vector<1x16x128xi32>
      %cst_17 = arith.constant dense<-2147483648> : vector<1xi32>
      %52 = vector.multi_reduction <maxsi>, %51, %cst_17 [1, 2] : vector<1x16x128xi32> to vector<1xi32>
      %53 = vector.shape_cast %52 : vector<1xi32> to vector<1x1x1xi32>
      %54 = vector.extract %53[0, 0, 0] : i32 from vector<1x1x1xi32>
      %55 = arith.maxsi %48, %54 : i32
      %c1_18 = arith.constant 1 : index
      %56 = memref.load %arg8[%c1_18] : memref<2xi32, #tpu.memory_space<smem>>
      memref.store %55, %arg8[%c1_18] : memref<2xi32, #tpu.memory_space<smem>>
    } else {
    }
    %c1_i32_8 = arith.constant 1 : i32
    %16 = arith.cmpi eq, %arg0, %c1_i32_8 : i32
    %c9_i32 = arith.constant 9 : i32
    %17 = arith.cmpi eq, %arg1, %c9_i32 : i32
    %18 = arith.andi %16, %17 : i1
    %19 = arith.extui %18 : i1 to i32
    %c0_i32_9 = arith.constant 0 : i32
    %20 = arith.cmpi ne, %19, %c0_i32_9 : i32
    scf.if %20 {
      %21 = tpu.iota {dimensions = array<i32: 1>} : vector<1x2xi32>
      %c0_i32_10 = arith.constant 0 : i32
      %22 = vector.broadcast %c0_i32_10 : i32 to vector<1x2xi32>
      %23 = arith.cmpi eq, %21, %22 : vector<1x2xi32>
      %c0 = arith.constant 0 : index
      %24 = memref.load %arg8[%c0] : memref<2xi32, #tpu.memory_space<smem>>
      %c1 = arith.constant 1 : index
      %25 = memref.load %arg8[%c1] : memref<2xi32, #tpu.memory_space<smem>>
      %c1_i32_11 = arith.constant 1 : i32
      %26 = arith.addi %25, %c1_i32_11 : i32
      %27 = vector.broadcast %24 : i32 to vector<1x2xi32>
      %28 = vector.broadcast %26 : i32 to vector<1x2xi32>
      %29 = arith.select %23, %27, %28 : vector<1x2xi1>, vector<1x2xi32>
      %c0_12 = arith.constant 0 : index
      %c0_13 = arith.constant 0 : index
      %30 = vector.load %arg4[%c0_12, %c0_13] : memref<1x2xi32, #tpu.memory_space<vmem>>, vector<1x2xi32>
      tpu.vector_store %arg4[%c0_12, %c0_13], %29 {strides = array<i32>} : memref<1x2xi32, #tpu.memory_space<vmem>>, vector<1x2xi32>,
    } else {
    }
    return
  }
  func.func @transform_0(%arg0: i32, %arg1: i32) -> (i32, i32, i32) {
    %c1_i32 = arith.constant 1 : i32
    %0 = arith.subi %c1_i32, %arg0 : i32
    %1 = arith.muli %arg1, %0 : i32
    %c0_i32 = arith.constant 0 : i32
    %c0_i32_0 = arith.constant 0 : i32
    %c0_i32_1 = arith.constant 0 : i32
    return %c0_i32, %1, %c0_i32_0 : i32, i32, i32
  }
  func.func @transform_1(%arg0: i32, %arg1: i32) -> (i32, i32) {
    %0 = arith.muli %arg1, %arg0 : i32
    %c0_i32 = arith.constant 0 : i32
    %c0_i32_0 = arith.constant 0 : i32
    return %0, %c0_i32 : i32, i32
  }
  func.func @transform_2(%arg0: i32, %arg1: i32) -> (i32, i32) {
    %c0_i32 = arith.constant 0 : i32
    %c0_i32_0 = arith.constant 0 : i32
    %c0_i32_1 = arith.constant 0 : i32
    return %c0_i32, %c0_i32_0 : i32, i32
  }
}

</mosaic_0001>

<llo_original>
// kernel: sox_effects_core.1
$region0: #{sox_effects_core.1}
  #allocation0 [shape = 'u32[]', space=smem, size = 0x4, offset = 0x4, fixed_abs, tag = 'smem constant byte address 0x4 - core index']
  #allocation1 [shape = 'u32[144,128]{1,0:T(1,128)}', space=vmem, size = 0x12000, scoped, tag = 'internal scratch']
  #allocation2 [shape = 'f32[10,16,128]{2,1,0:T(8,128)}', space=vmem, size = 0x14000, scoped, tag = 'scratch operand']
  #allocation3 [shape = 'f32[16,128]{1,0:T(8,128)}', space=vmem, size = 0x2000, scoped, tag = 'scratch operand']
  #allocation4 [shape = 'f32[1]{0:T(128)}', space=smem, size = 0x200, scoped, tag = 'scratch operand']
  #allocation5 [shape = 's32[2]{0:T(128)}', space=smem, size = 0x200, scoped, tag = 'scratch operand']
  %s0 = inlined_call_operand.vmem [shape: f32[2,160,128], index: 0, kind: input, shape index: {}]
  %s1 = inlined_call_operand.hbm [shape: f32[160,128], index: 1, kind: output, shape index: {0}]
  %s2 = inlined_call_operand.hbm [shape: s32[1,2], index: 2, kind: output, shape index: {1}]
  %3 = xla_tuple %s1, %s2
  %s4 = sld [smem:[#allocation0]]
  $region103: #{sox_effects_core.1} parent=0
    _
  %s6 = ssub.s32 1, %s4
  %s7 = scalar_select 0, %s6, %s4
  $region1: #{sox_effects_core.1} parent=0
    #allocation6 [shape = 'u8[32768]{0}', space=vmem, size = 0x8000, scoped, tag = 'input window, operand 0']
    #allocation7 [shape = 'u8[16384]{0}', space=vmem, size = 0x4000, scoped, tag = 'output window, operand 0']
    #allocation8 [shape = 's32[2]{0}', space=sflag, size = 0x8, scoped, tag = 'scoped memory for sox_effects_core.1']
    #allocation9 [shape = 'u8[512]{0}', space=vmem, size = 0x400, scoped, tag = 'output window, operand 1, single buffered']
    #allocation10 [shape = 's32[1]{0}', space=sflag, size = 0x4, scoped, tag = 'scoped memory for sox_effects_core.1']
    %8 = vsyncpa [#allocation8], 0
    %s9 = scalar_lea.sflag [#allocation8], 1
    %10 = vsyncpa %s9, 0
    %11 = vsyncpa [#allocation10], 0
    loop: start=0, step=1, limit=22
    $region2: #{sox_effects_core.1} parent=1 // loop_pre_header
      _
    $region3: #{sox_effects_core.1} parent=1 // loop_header
      %s13 = sphi 0, %s17
      %p14 = scmp.ge.s32.totalorder %s13, 22
      %s20 = sphi 0, %s32
      %s21 = sphi 0, %s28
      %s22 = sphi 0, %s20
      %s23 = sphi 0, %s21
      %s24 = sphi 0, %s22
      %s25 = sphi 0, %s23
      %s39 = sphi 0, %s41
      %s42 = sphi 0, %s39
      %s43 = sphi 0, %s42
      %s59 = sphi 0, %s43
      %s67 = sphi 0, %s69
      %s70 = sphi 0, %s67
      %s71 = sphi 0, %s70
      %s87 = sphi 0, %s71
      %s91 = sphi 0, %s91
      %s93 = sphi 0, %s91
      %s94 = sphi 0, %s93
      %s108 = sphi 0, %s94
    $region4: #{sox_effects_core.1} parent=1 // loop_header_branch
      %16 = sbr.rel (%p14) target = $region8
    $region5: #{sox_effects_core.1} parent=1 // loop_body
      %s18 = ssub.s32 %s13, 1
      %s19 = ssub.s32 %s13, 2
      %s26 = sadd.s32 1, %s21
      %p27 = scmp.ge.s32.totalorder %s26, 10
      %s28 = scalar_select %p27, 0, %s26
      %s29 = sadd.s32 1, %s20
      %s30 = scalar_select %p27, %s29, %s20
      %p31 = scmp.ge.s32.totalorder %s30, 2
      %s32 = scalar_select %p31, 0, %s30
      %s33 = ssub.s32 1, %s20
      %s34 = smul.u32 %s21, %s33
      %s35 = ssub.s32 1, %s32
      %s36 = smul.u32 %s28, %s35
      %s37 = ssub.s32 %s34, %s36
      %p38 = scmp.eq.s32.totalorder %s37, 0
      %s40 = sadd.s32 %s39, 1
      %s41 = scalar_select %p38, %s39, %s40
      %p44 = pneg %p38
      %p45 = scmp.eq.s32.totalorder %s13, 19
      %p46 = por %p44, %p45
      %p47 = scmp.ne.s32.totalorder %s39, %s42
      %p48 = scmp.eq.s32.totalorder %s13, 0
      %p49 = por %p47, %p48
      %p50 = scmp.ne.s32.totalorder %s39, %s42
      %p51 = scmp.eq.s32.totalorder %s18, 19
      %p52 = por %p50, %p51
      %p53 = scmp.ne.s32.totalorder %s42, %s43
      %p54 = scmp.eq.s32.totalorder %s18, 0
      %p55 = por %p53, %p54
      %p56 = scmp.ne.s32.totalorder %s42, %s43
      %p57 = scmp.eq.s32.totalorder %s19, 19
      %p58 = por %p56, %p57
      %p60 = scmp.ne.s32.totalorder %s43, %s59
      %p61 = scmp.eq.s32.totalorder %s19, 0
      %p62 = por %p60, %p61
      %s63 = smul.u32 %s21, %s20
      %s64 = smul.u32 %s28, %s32
      %s65 = ssub.s32 %s63, %s64
      %p66 = scmp.eq.s32.totalorder %s65, 0
      %s68 = sadd.s32 %s67, 1
      %s69 = scalar_select %p66, %s67, %s68
      %p72 = pneg %p66
      %p73 = scmp.eq.s32.totalorder %s13, 19
      %p74 = por %p72, %p73
      %p75 = scmp.ne.s32.totalorder %s67, %s70
      %p76 = scmp.eq.s32.totalorder %s13, 0
      %p77 = por %p75, %p76
      %p78 = scmp.ne.s32.totalorder %s67, %s70
      %p79 = scmp.eq.s32.totalorder %s18, 19
      %p80 = por %p78, %p79
      %p81 = scmp.ne.s32.totalorder %s70, %s71
      %p82 = scmp.eq.s32.totalorder %s18, 0
      %p83 = por %p81, %p82
      %p84 = scmp.ne.s32.totalorder %s70, %s71
      %p85 = scmp.eq.s32.totalorder %s19, 19
      %p86 = por %p84, %p85
      %p88 = scmp.ne.s32.totalorder %s71, %s87
      %p89 = scmp.eq.s32.totalorder %s19, 0
      %p90 = por %p88, %p89
      %s92 = sadd.s32 %s91, 1
      %p95 = scmp.eq.s32.totalorder %s13, 19
      %p96 = scmp.ne.s32.totalorder %s91, %s93
      %p97 = scmp.eq.s32.totalorder %s13, 0
      %p98 = por %p96, %p97
      %p99 = scmp.ne.s32.totalorder %s91, %s93
      %p100 = scmp.eq.s32.totalorder %s18, 19
      %p101 = por %p99, %p100
      %p102 = scmp.ne.s32.totalorder %s93, %s94
      %p103 = scmp.eq.s32.totalorder %s18, 0
      %p104 = por %p102, %p103
      %p105 = scmp.ne.s32.totalorder %s93, %s94
      %p106 = scmp.eq.s32.totalorder %s19, 19
      %p107 = por %p105, %p106
      %p109 = scmp.ne.s32.totalorder %s94, %s108
      %p110 = scmp.eq.s32.totalorder %s19, 0
      %p111 = por %p109, %p110
      %p112 = scmp.le.s32.totalorder 1, %s13
      %p113 = scmp.lt.s32.totalorder %s13, 21
      %p114 = pnand %p112, %p113
      %p115 = pneg %p114
      // Predicated region
      $region9: #{sox_effects_core.1} parent=5 // pred_check
        _
      $region10: #{sox_effects_core.1} parent=5 // pred_check_branch
        %117 = sbr.rel (%p114) target = $region12
      $region11: #{sox_effects_core.1} parent=5 // pred_region
        %s118 = ssub.s32 %s13, 1
      $region12: #{sox_effects_core.1} parent=5 // pred_fallthru
        _
      %p119 = scmp.lt.s32.totalorder %s13, 20
      // Predicated region
      $region13: #{sox_effects_core.1} parent=5 // pred_check
        %p120 = pneg %p119
      $region14: #{sox_effects_core.1} parent=5 // pred_check_branch
        %122 = sbr.rel (%p120) target = $region16
      $region15: #{sox_effects_core.1} parent=5 // pred_region
        // Predicated region
        $region17: #{sox_effects_core.1} parent=15 // pred_check
          %p123 = pneg %p49
        $region18: #{sox_effects_core.1} parent=15 // pred_check_branch
          %125 = sbr.rel (%p123) target = $region20
        $region19: #{sox_effects_core.1} parent=15 // pred_region
          %s126 = sand.u32 %s39, 1
          %s127 = sand.u32 %s39, 1
          %s128 = smul.addr %s127, 32
          %s129 = scalar_lea.vmem [#allocation6], %s128
          %s130 = ssub.s32 1, %s20
          %s131 = smul.u32 %s21, %s130
          %s132 = smul.u32 2, %s131
          %s133 = smul.addr %s132, 8
          %s134 = scalar_lea.vmem %s0, %s133
          // Predicated region
          $region21: #{sox_effects_core.1} parent=19 // pred_check
            _
          $region22: #{sox_effects_core.1} parent=19 // pred_check_branch
            %136 = sbr.rel (0) target = $region24
          $region23: #{sox_effects_core.1} parent=19 // pred_region
            // Predicated region
            $region25: #{sox_effects_core.1} parent=23 // pred_check
              _
            $region26: #{sox_effects_core.1} parent=23 // pred_check_branch
              %138 = sbr.rel (0) target = $region28
            $region27: #{sox_effects_core.1} parent=23 // pred_region
              // Predicated region
              $region40: #{sox_effects_core.1} parent=27 // pred_check
                _
              $region41: #{sox_effects_core.1} parent=27 // pred_check_branch
                %160 = sbr.rel (0) target = $region43
              $region42: #{sox_effects_core.1} parent=27 // pred_region
                loop: start=0, step=1, limit=1
                $region44: #{sox_effects_core.1} parent=42 // loop_pre_header
                  _
                $region45: #{sox_effects_core.1} parent=42 // loop_header
                  %s162 = sphi 0, %s166
                  %p163 = scmp.ge.s32.totalorder %s162, 1
                  %s167 = sphi %s134, %s134
                  %s168 = sphi %s129, %s129
                $region46: #{sox_effects_core.1} parent=42 // loop_header_branch
                  %165 = sbr.rel (%p163) target = $region50
                $region47: #{sox_effects_core.1} parent=42 // loop_body
                  %v169 = vld [vmem:[%s167] sm:$0xff]
                  %170 = vst [vmem:[%s168] sm:$0xff] %v169
                  %v171 = vld [vmem:[%s167 + $0x8] sm:$0xff]
                  %172 = vst [vmem:[%s168 + $0x8] sm:$0xff] %v171
                  %v173 = vld [vmem:[%s167 + $0xa0] sm:$0xff]
                  %174 = vst [vmem:[%s168 + $0x10] sm:$0xff] %v173
                  %v175 = vld [vmem:[%s167 + $0xa8] sm:$0xff]
                  %176 = vst [vmem:[%s168 + $0x18] sm:$0xff] %v175
                $region48: #{sox_effects_core.1} parent=42 // loop_footer
                  %s166 = sadd.s32 1, %s162
                $region49: #{sox_effects_core.1} parent=42 // loop_footer_branch
                  %161 = sbr.rel target = $region45
                $region50: #{sox_effects_core.1} parent=42 // loop_exit
                  _
              $region43: #{sox_effects_core.1} parent=27 // pred_fallthru
                _
              // Predicated region
              $region51: #{sox_effects_core.1} parent=27 // pred_check
                _
              $region52: #{sox_effects_core.1} parent=27 // pred_check_branch
                %178 = sbr.rel target = $region54
              $region53: #{sox_effects_core.1} parent=27 // pred_region
                _
              $region54: #{sox_effects_core.1} parent=27 // pred_fallthru
                _
            $region28: #{sox_effects_core.1} parent=23 // pred_fallthru
              _
            // Predicated region
            $region29: #{sox_effects_core.1} parent=23 // pred_check
              _
            $region30: #{sox_effects_core.1} parent=23 // pred_check_branch
              %140 = sbr.rel target = $region32
            $region31: #{sox_effects_core.1} parent=23 // pred_region
              %s142 = ssub.s32 256, 1
              loop: start=0, step=1, limit=1
              $region33: #{sox_effects_core.1} parent=31 // loop_pre_header
                _
              $region34: #{sox_effects_core.1} parent=31 // loop_header
                %s144 = sphi 0, %s148
                %p145 = scmp.ge.s32.totalorder %s144, 1
                %s149 = sphi %s134, %s134
                %s150 = sphi %s129, %s129
              $region35: #{sox_effects_core.1} parent=31 // loop_header_branch
                %147 = sbr.rel (%p145) target = $region39
              $region36: #{sox_effects_core.1} parent=31 // loop_body
                %v151 = vld [vmem:[%s149] sm:%s142]
                %152 = vst [vmem:[%s150] sm:%s142] %v151
                %v153 = vld [vmem:[%s149 + $0x8] sm:%s142]
                %154 = vst [vmem:[%s150 + $0x8] sm:%s142] %v153
                %v155 = vld [vmem:[%s149 + $0xa0] sm:%s142]
                %156 = vst [vmem:[%s150 + $0x10] sm:%s142] %v155
                %v157 = vld [vmem:[%s149 + $0xa8] sm:%s142]
                %158 = vst [vmem:[%s150 + $0x18] sm:%s142] %v157
              $region37: #{sox_effects_core.1} parent=31 // loop_footer
                %s148 = sadd.s32 1, %s144
              $region38: #{sox_effects_core.1} parent=31 // loop_footer_branch
                %143 = sbr.rel target = $region34
              $region39: #{sox_effects_core.1} parent=31 // loop_exit
                _
            $region32: #{sox_effects_core.1} parent=23 // pred_fallthru
              _
          $region24: #{sox_effects_core.1} parent=19 // pred_fallthru
            _
          %179 = vnop
        $region20: #{sox_effects_core.1} parent=15 // pred_fallthru
          _
      $region16: #{sox_effects_core.1} parent=5 // pred_fallthru
        _
      %p180 = scmp.le.s32.totalorder 1, %s13
      %p181 = scmp.lt.s32.totalorder %s13, 21
      %p182 = pnand %p180, %p181
      %p183 = pneg %p182
      // Predicated region
      $region55: #{sox_effects_core.1} parent=5 // pred_check
        _
      $region56: #{sox_effects_core.1} parent=5 // pred_check_branch
        %185 = sbr.rel (%p182) target = $region58
      $region57: #{sox_effects_core.1} parent=5 // pred_region
        %s186 = ssub.s32 %s13, 1
        %s187 = sand.u32 %s42, 1
        %s188 = sand.u32 %s42, 1
        %s189 = smul.addr %s188, 32
        %s190 = scalar_lea.vmem [#allocation6], %s189
        // Predicated region
        $region59: #{sox_effects_core.1} parent=57 // pred_check
          %p191 = pneg %p55
        $region60: #{sox_effects_core.1} parent=57 // pred_check_branch
          %193 = sbr.rel (%p191) target = $region62
        $region61: #{sox_effects_core.1} parent=57 // pred_region
          _
        $region62: #{sox_effects_core.1} parent=57 // pred_fallthru
          _
        %s194 = sand.u32 %s42, 1
        %s195 = sand.u32 %s42, 1
        %s196 = smul.addr %s195, 32
        %s197 = scalar_lea.vmem [#allocation6], %s196
        %p198 = pneg %p55
        %p199 = pneg %p52
        %p200 = pneg %p83
        %p201 = pneg %p80
        %s202 = sand.u32 %s70, 1
        %s203 = scalar_lea.sflag [#allocation8], %s202
        %s204 = sand.u32 %s70, 1
        %s205 = smul.addr %s204, 16
        %s206 = scalar_lea.vmem [#allocation7], %s205
        %p207 = pneg %p104
        %p208 = pneg %p101
        %s209 = ssub.s32 1, %s22
        %s210 = smul.u32 %s23, %s209
        %s211 = smul.u32 2, %s210
        %s212 = smul.u32 %s23, %s22
        %s213 = smul.u32 2, %s212
        %p214 = scmp.eq.s32.totalorder %s22, 0
        %p215 = scmp.eq.s32.totalorder %s23, 0
        %p216 = pnand %p214, %p215
        %p217 = pneg %p216
        // Predicated region
        $region63: #{sox_effects_core.1} parent=57 // pred_check
          _
        $region64: #{sox_effects_core.1} parent=57 // pred_check_branch
          %219 = sbr.rel (%p216) target = $region66
        $region65: #{sox_effects_core.1} parent=57 // pred_region
          %220 = vst [vmem:[#allocation3] sm:$0xff] 0.0
          %221 = vst [vmem:[#allocation3 + $0x8] sm:$0xff] 0.0
          %s222 = scalar_lea.smem [#allocation5], 0
          %223 = sst [smem:[%s222]] 1073741824
          %s224 = scalar_lea.smem [#allocation5], 1
          %225 = sst [smem:[%s224]] 4294967295
        $region66: #{sox_effects_core.1} parent=57 // pred_fallthru
          _
        // Predicated region
        $region67: #{sox_effects_core.1} parent=57 // pred_check
          %p226 = pneg %p214
        $region68: #{sox_effects_core.1} parent=57 // pred_check_branch
          %228 = sbr.rel (%p226) target = $region70
        $region69: #{sox_effects_core.1} parent=57 // pred_region
          %v229 = vld [vmem:[%s190] sm:$0xff]
          %v230 = vld [vmem:[%s190 + $0x8] sm:$0xff]
          %s231 = scalar_lea.vmem %s190, 16 [#allocation6]
          %v232 = vld [vmem:[%s231] sm:$0xff]
          %v233 = vld [vmem:[%s231 + $0x8] sm:$0xff]
          %v234 = vadd.f32 %v229, %v232
          %v235 = vadd.f32 %v230, %v233
          %v236 = vmul.f32 %v234, 0.5
          %v237 = vmul.f32 %v235, 0.5
          %s238 = smul.u32 %s23, 16
          %s239 = scalar_lea.vmem [#allocation2], %s238
          %240 = vst [vmem:[%s239] sm:$0xff] %v236
          %241 = vst [vmem:[%s239 + $0x8] sm:$0xff] %v237
          %v242 = vld [vmem:[#allocation3] sm:$0xff]
          %v243 = vld [vmem:[#allocation3 + $0x8] sm:$0xff]
          %v244 = vand.u32 2147483647, %v236
          %v245 = vand.u32 2147483647, %v237
          %v246 = vmax.f32 %v242, %v244
          %v247 = vmax.f32 %v243, %v245
          %248 = vst [vmem:[#allocation3] sm:$0xff] %v246
          %249 = vst [vmem:[#allocation3 + $0x8] sm:$0xff] %v247
        $region70: #{sox_effects_core.1} parent=57 // pred_fallthru
          _
        %p250 = scmp.eq.s32.totalorder %s22, 1
        %p251 = pnand %p250, %p215
        %p252 = pneg %p251
        // Predicated region
        $region71: #{sox_effects_core.1} parent=57 // pred_check
          _
        $region72: #{sox_effects_core.1} parent=57 // pred_check_branch
          %254 = sbr.rel (%p251) target = $region74
        $region73: #{sox_effects_core.1} parent=57 // pred_region
          %v255 = vld [vmem:[#allocation3] sm:$0xff]
          %v256 = vld [vmem:[#allocation3 + $0x8] sm:$0xff]
          %v257 = vmax.f32 %v255, %v256
          %258 = vmax.xlane.f32.xlu0 %v257
          %v259 = vpop.xlane.xlu0 %258
          %v260 = vrot.slane %v259, 4
          %v261 = vmax.f32 %v259, %v260
          %v262 = vrot.slane %v261, 2
          %v263 = vmax.f32 %v261, %v262
          %v264 = vrot.slane %v263, 1
          %v265 = vmax.f32 %v263, %v264
          %s266 = vtos %v265
          %s267 = smax.f32 %s266, 1e-30
          %p268 = scmp.gt.f32.partialorder %s266, 0.0
          %v269 = vstv %s267
          %v270 = vrcp.pop %v269
          %s271 = vtos %v270
          %s272 = smul.f32 0.70794576, %s271
          %s273 = scalar_select %p268, %s272, 1.0
          %s274 = scalar_lea.smem [#allocation4], 0
          %275 = sst [smem:[%s274]] %s273
        $region74: #{sox_effects_core.1} parent=57 // pred_fallthru
          _
        // Predicated region
        $region75: #{sox_effects_core.1} parent=57 // pred_check
          %p276 = pneg %p250
        $region76: #{sox_effects_core.1} parent=57 // pred_check_branch
          %278 = sbr.rel (%p276) target = $region78
        $region77: #{sox_effects_core.1} parent=57 // pred_region
          %s279 = smul.u32 %s23, 16
          %s280 = scalar_lea.vmem [#allocation2], %s279
          %v281 = vld [vmem:[%s280] sm:$0xff]
          %v282 = vld [vmem:[%s280 + $0x8] sm:$0xff]
          %s283 = sld [smem:[#allocation4]]
          %v284 = vstv %s283
          %v285 = vmul.f32 %v281, %v284
          %v286 = vmul.f32 %v282, %v284
          %287 = vst [vmem:[%s206] sm:$0xff] %v285
          %288 = vst [vmem:[%s206 + $0x8] sm:$0xff] %v286
          %v289 = vlaneseq
          %v290 = vshrl.u32 %v289, 7
          %v291 = vadd.s32 %v290, 8
          %v292 = vlaneseq
          %v293 = vand.u32 %v292, 127
          %v294 = vstv %s279
          %v295 = vadd.s32 %v294, %v290
          %v296 = vadd.s32 %v294, %v291
          %v297 = vmul.u32 %v295, 128
          %v298 = vmul.u32 %v296, 128
          %v299 = vadd.s32 %v297, %v293
          %v300 = vadd.s32 %v298, %v293
          %v301 = vand.u32 2147483647, %v285
          %v302 = vand.u32 2147483647, %v286
          %vm303 = vcmp.gt.f32.partialorder %v301, 0.01
          %vm304 = vcmp.gt.f32.partialorder %v302, 0.01
          %s305 = sld [smem:[#allocation5]]
          %v306 = vsel %vm303, %v299, 1073741824
          %v307 = vsel %vm304, %v300, 1073741824
          %vm308 = vcmp.lt.s32.totalorder %v306, %v307
          %v309 = vsel %vm308, %v306, %v307
          %v310 = vand.u32 %v309, 65535
          %v311 = vshra.s32 %v309, 16
          %v312 = vcvt.s32.f32 %v310
          %v313 = vcvt.s32.f32 %v311
          %314 = vmin.xlane.f32.xlu0 %v313
          %v315 = vpop.xlane.xlu0 %314
          %vm316 = vcmp.eq.f32.partialorder %v313, %v315
          %v317 = vsel %vm316, %v312, inf
          %318 = vmin.xlane.f32.xlu0 %v317
          %v319 = vpop.xlane.xlu0 %318
          %v320 = vcvt.f32.s32 %v319
          %v321 = vcvt.f32.s32 %v315
          %v322 = vshll.u32 %v321, 16
          %v323 = vadd.s32 %v322, %v320
          %v324 = vrot.slane %v323, 4
          %vm325 = vcmp.lt.s32.totalorder %v323, %v324
          %v326 = vsel %vm325, %v323, %v324
          %v327 = vrot.slane %v326, 2
          %vm328 = vcmp.lt.s32.totalorder %v326, %v327
          %v329 = vsel %vm328, %v326, %v327
          %v330 = vrot.slane %v329, 1
          %vm331 = vcmp.lt.s32.totalorder %v329, %v330
          %v332 = vsel %vm331, %v329, %v330
          %s333 = vtos %v332
          %p334 = scmp.lt.s32.totalorder %s305, %s333
          %s335 = scalar_select %p334, %s305, %s333
          %s336 = scalar_lea.smem [#allocation5], 0
          %337 = sst [smem:[%s336]] %s335
          %s338 = sld [smem:[#allocation5 + $0x1]]
          %v339 = vsel %vm303, %v299, 4294967295
          %v340 = vsel %vm304, %v300, 4294967295
          %vm341 = vcmp.gt.s32.totalorder %v339, %v340
          %v342 = vsel %vm341, %v339, %v340
          %v343 = vand.u32 %v342, 65535
          %v344 = vshra.s32 %v342, 16
          %v345 = vcvt.s32.f32 %v343
          %v346 = vcvt.s32.f32 %v344
          %347 = vmax.xlane.f32.xlu0 %v346
          %v348 = vpop.xlane.xlu0 %347
          %vm349 = vcmp.eq.f32.partialorder %v346, %v348
          %v350 = vsel %vm349, %v345, -inf
          %351 = vmax.xlane.f32.xlu0 %v350
          %v352 = vpop.xlane.xlu0 %351
          %v353 = vcvt.f32.s32 %v352
          %v354 = vcvt.f32.s32 %v348
          %v355 = vshll.u32 %v354, 16
          %v356 = vadd.s32 %v355, %v353
          %v357 = vrot.slane %v356, 4
          %vm358 = vcmp.gt.s32.totalorder %v356, %v357
          %v359 = vsel %vm358, %v356, %v357
          %v360 = vrot.slane %v359, 2
          %vm361 = vcmp.gt.s32.totalorder %v359, %v360
          %v362 = vsel %vm361, %v359, %v360
          %v363 = vrot.slane %v362, 1
          %vm364 = vcmp.gt.s32.totalorder %v362, %v363
          %v365 = vsel %vm364, %v362, %v363
          %s366 = vtos %v365
          %p367 = scmp.gt.s32.totalorder %s338, %s366
          %s368 = scalar_select %p367, %s338, %s366
          %s369 = scalar_lea.smem [#allocation5], 1
          %370 = sst [smem:[%s369]] %s368
        $region78: #{sox_effects_core.1} parent=57 // pred_fallthru
          _
        %p371 = scmp.eq.s32.totalorder %s23, 9
        %p372 = pnand %p250, %p371
        %p373 = pneg %p372
        // Predicated region
        $region79: #{sox_effects_core.1} parent=57 // pred_check
          _
        $region80: #{sox_effects_core.1} parent=57 // pred_check_branch
          %375 = sbr.rel (%p372) target = $region82
        $region81: #{sox_effects_core.1} parent=57 // pred_region
          %v376 = vlaneseq
          %v377 = vand.u32 %v376, 127
          %vm378 = vcmp.eq.s32.totalorder %v377, 0
          %s379 = sld [smem:[#allocation5]]
          %s380 = sld [smem:[#allocation5 + $0x1]]
          %s381 = sadd.s32 %s380, 1
          %v382 = vstv %s379
          %v383 = vstv %s381
          %v384 = vsel %vm378, %v382, %v383
          %vm385 = vcmask 8192
          %386 = vst.msk [vmem:[#allocation9] sm:$0x1] %vm385, %v384
        $region82: #{sox_effects_core.1} parent=57 // pred_fallthru
          _
        %s387 = sand.u32 %s70, 1
        %s388 = scalar_lea.sflag [#allocation8], %s387
        %s389 = sand.u32 %s70, 1
        %s390 = smul.addr %s389, 16
        %s391 = scalar_lea.vmem [#allocation7], %s390
        // Predicated region
        $region83: #{sox_effects_core.1} parent=57 // pred_check
          %p392 = pneg %p80
        $region84: #{sox_effects_core.1} parent=57 // pred_check_branch
          %394 = sbr.rel (%p392) target = $region86
        $region85: #{sox_effects_core.1} parent=57 // pred_region
          %s395 = smul.u32 %s23, %s22
          %s396 = smul.u32 2, %s395
          %s398 = ssub.s32 256, 256
          %399 = vsyncadd %s388, %s398
          %s400 = smul.addr %s396, 128
          %s401 = scalar_lea.hbm %s1, %s400
          %s402 = sshll.u32 %s391, 4
          %s403 = int_to_ptr.vmem [resolvable:$true] %s402
          %408 = dma.vmem_to_hbm [thread:$0]  %s403, 256, %s401, %s388, 128, 128, 8
        $region86: #{sox_effects_core.1} parent=57 // pred_fallthru
          _
        // Predicated region
        $region87: #{sox_effects_core.1} parent=57 // pred_check
          %p409 = pneg %p101
        $region88: #{sox_effects_core.1} parent=57 // pred_check_branch
          %411 = sbr.rel (%p409) target = $region90
        $region89: #{sox_effects_core.1} parent=57 // pred_region
          %s413 = ssub.s32 16, 16
          %414 = vsyncadd [#allocation10], %s413
          %s416 = sshll.u32 [#allocation9], 4
          %s417 = int_to_ptr.vmem [resolvable:$true] %s416
          %419 = dma.vmem_to_hbm [thread:$0]  %s417, 16, %s2, [#allocation10]
        $region90: #{sox_effects_core.1} parent=57 // pred_fallthru
          _
        // Predicated region
        $region91: #{sox_effects_core.1} parent=57 // pred_check
          %p420 = pneg %p101
        $region92: #{sox_effects_core.1} parent=57 // pred_check_branch
          %422 = sbr.rel (%p420) target = $region94
        $region93: #{sox_effects_core.1} parent=57 // pred_region
          %423 = dma.done [#allocation10], 16
        $region94: #{sox_effects_core.1} parent=57 // pred_fallthru
          _
      $region58: #{sox_effects_core.1} parent=5 // pred_fallthru
        _
      %p424 = scmp.le.s32.totalorder 2, %s13
      // Predicated region
      $region95: #{sox_effects_core.1} parent=5 // pred_check
        %p425 = pneg %p424
      $region96: #{sox_effects_core.1} parent=5 // pred_check_branch
        %427 = sbr.rel (%p425) target = $region98
      $region97: #{sox_effects_core.1} parent=5 // pred_region
        %s428 = ssub.s32 %s13, 2
        // Predicated region
        $region99: #{sox_effects_core.1} parent=97 // pred_check
          %p429 = pneg %p86
        $region100: #{sox_effects_core.1} parent=97 // pred_check_branch
          %431 = sbr.rel (%p429) target = $region102
        $region101: #{sox_effects_core.1} parent=97 // pred_region
          %s432 = sand.u32 %s71, 1
          %s433 = scalar_lea.sflag [#allocation8], %s432
          %s434 = sand.u32 %s71, 1
          %s435 = smul.addr %s434, 16
          %s436 = scalar_lea.vmem [#allocation7], %s435
          %437 = dma.done %s433, 256
        $region102: #{sox_effects_core.1} parent=97 // pred_fallthru
          _
      $region98: #{sox_effects_core.1} parent=5 // pred_fallthru
        _
    $region6: #{sox_effects_core.1} parent=1 // loop_footer
      %s17 = sadd.s32 1, %s13
    $region7: #{sox_effects_core.1} parent=1 // loop_footer_branch
      %12 = sbr.rel target = $region3
    $region8: #{sox_effects_core.1} parent=1 // loop_exit
      _
    %438 = vsyncpa [#allocation8], 1
    %s439 = scalar_lea.sflag [#allocation8], 1
    %440 = vsyncpa %s439, 1
    %441 = vsyncpa [#allocation10], 1

</llo_original>
